<compile_context>
chip_gen: v7x
topology: tpu7x:2x2x1
jax: 0.10.0
libtpu: 0.0.40
codegen_flags: <defaults>
</compile_context>

<pallas_src>
import numpy as np
import jax
import jax.numpy as jnp
from jax import lax
from jax.experimental import pallas as pl
from jax.experimental.pallas import tpu as pltpu

# ----------------------------------------------------------------------------
# Deterministic "parameters": Gaussian window (same formula as the module).
# ----------------------------------------------------------------------------
K = 11                      # window_size
SIGMA = 1.5
PAD = K // 2
_xs = np.arange(K, dtype=np.float64)
_g = np.exp(-((_xs - K // 2) ** 2) / (2.0 * SIGMA * SIGMA))
_g = (_g / _g.sum()).astype(np.float32)        # 1-D separable weights (sum to 1)
WIN2D = np.outer(_g, _g).astype(np.float32)    # 2-D window (for the JAX reference)

ALPHA, BETA, GAMMA = 0.4, 0.3, 0.3
C1 = 0.01 ** 2
C2 = 0.03 ** 2

# The conv matmuls run on the MXU in this dtype (f32 accumulation). Set to
# jnp.float32 to fall back to the exact (but MXU-emulated, ~3x slower) path.
CONV_DTYPE = jnp.bfloat16


def _band_matrix(n):
    """(n, n) banded matrix M with M[i, j] = g[j - i + PAD]; M @ x == same-size
    1-D Gaussian conv of x with zero padding (the zero pad is implicit in the
    truncated band at the borders)."""
    m = np.zeros((n, n), dtype=np.float32)
    for i in range(n):
        for d in range(K):
            j = i + d - PAD
            if 0 <= j < n:
                m[i, j] += _g[d]
    return m


# ----------------------------------------------------------------------------
# Pallas kernel: one full sample (all C channels, lane-packed as (H, C*W)) per
# grid step.  Emits 7 partial sums (ssim_map sum, |p-t| sum, and the 5 raw
# moments needed for Pearson) into a lane-dense (1, 8, 128) output block.
# ----------------------------------------------------------------------------
def _combined_loss_kernel(pred_ref, targ_ref, bh_ref, bd_ref, out_ref):
    p = pred_ref[0].astype(jnp.float32)          # (H, C*W), f32
    t = targ_ref[0].astype(jnp.float32)
    bh = bh_ref[...]                             # (H, H) band matrix   (CONV_DTYPE)
    bd = bd_ref[...]                             # (C*W, C*W) block-diag band matrix

    def gconv(x):
        # Separable 11x11 Gaussian "same" conv (zero padding) as two lane-dense
        # MXU matmuls:  rows:  BH @ X   ;   cols (per channel): X @ blockdiag(BW^T)
        v = jnp.dot(bh, x.astype(CONV_DTYPE), preferred_element_type=jnp.float32)
        return jnp.dot(v.astype(CONV_DTYPE), bd, preferred_element_type=jnp.float32)

    # L1 / NPCC raw-moment partial sums, taken immediately so the live temporary
    # set stays small.  All sums are computed from the original f32 values.
    s_abs = jnp.sum(jnp.abs(p - t))
    s_p = jnp.sum(p)
    s_t = jnp.sum(t)
    pp = p * p
    s_pp = jnp.sum(pp)
    tt = t * t
    s_tt = jnp.sum(tt)
    pt = p * t
    s_pt = jnp.sum(pt)

    # SSIM path (conv outputs consumed as produced).
    mu1 = gconv(p)
    mu2 = gconv(t)
    mu1_sq = mu1 * mu1
    mu2_sq = mu2 * mu2
    mu1_mu2 = mu1 * mu2
    sigma1_sq = gconv(pp) - mu1_sq
    sigma2_sq = gconv(tt) - mu2_sq
    sigma12 = gconv(pt) - mu1_mu2

    num = (2.0 * mu1_mu2 + C1) * (2.0 * sigma12 + C2)
    den = (mu1_sq + mu2_sq + C1) * (sigma1_sq + sigma2_sq + C2)
    s_ssim = jnp.sum(num / den)

    # Partial sums for this sample (7 scalars -> sublanes 0..6 of the block).
    vals = (s_ssim, s_abs, s_p, s_t, s_pp, s_tt, s_pt)
    rid = lax.broadcasted_iota(jnp.int32, (8, 128), 0)
    blk = jnp.zeros((8, 128), jnp.float32)
    for r, v in enumerate(vals):
        blk = jnp.where(rid == r, v, blk)
    out_ref[0] = blk


# ----------------------------------------------------------------------------
# Wrapper: grid over B (one sample per step), tiny final combination in JAX.
# ----------------------------------------------------------------------------
def combined_loss(pred, target):
    B, C, H, W = pred.shape
    CW = C * W
    n = C * H * W                         # elements per sample

    # Lane-packed layout: (B, C, H, W) -> (B, H, C*W); channels sit side by side
    # along the lane axis so both conv matmuls are lane-dense.
    xp = jnp.transpose(pred, (0, 2, 1, 3)).reshape(B, H, CW)
    xt = jnp.transpose(target, (0, 2, 1, 3)).reshape(B, H, CW)

    bh = jnp.asarray(_band_matrix(H), dtype=CONV_DTYPE)                      # (H, H)
    bd = jnp.asarray(np.kron(np.eye(C, dtype=np.float32), _band_matrix(W).T),
                     dtype=CONV_DTYPE)                                        # (CW, CW)
    # TODO(synk): for large W the dense (C*W, C*W) block-diag band matrix wastes
    # VMEM/FLOPs; switch to block-banded (T, T+2*PAD) tiles with haloed slices.

    parts = pl.pallas_call(
        _combined_loss_kernel,
        out_shape=jax.ShapeDtypeStruct((B, 8, 128), jnp.float32),
        grid=(B,),
        in_specs=[
            pl.BlockSpec((1, H, CW), lambda b: (b, 0, 0)),
            pl.BlockSpec((1, H, CW), lambda b: (b, 0, 0)),
            pl.BlockSpec((H, H), lambda b: (0, 0)),      # grid-invariant band matrix
            pl.BlockSpec((CW, CW), lambda b: (0, 0)),    # grid-invariant band matrix
        ],
        out_specs=pl.BlockSpec((1, 8, 128), lambda b: (b, 0, 0)),
        compiler_params=pltpu.CompilerParams(
            dimension_semantics=("parallel",),   # independent samples -> 2 TCs on v7x
            vmem_limit_bytes=32 * 1024 * 1024,   # explicit (v5e scoped default is 16 MiB)
        ),
    )(xp, xt, bh, bd)

    # Final (tiny) combination: 7 scalars per sample.
    p8 = parts[:, :, 0]                    # (B, 8)
    ssim_sum = jnp.sum(p8[:, 0])
    abs_sum = jnp.sum(p8[:, 1])
    sp, st = p8[:, 2], p8[:, 3]
    spp, stt, spt = p8[:, 4], p8[:, 5], p8[:, 6]

    cov = spt - sp * st / n
    varp = spp - sp * sp / n
    vart = stt - st * st / n
    npcc_val = -jnp.mean(cov / jnp.sqrt(varp * vart))

    l1_val = abs_sum / (B * n)
    ssim_loss = 1.0 - ssim_sum / (B * n)

    return ALPHA * npcc_val + BETA * l1_val + GAMMA * ssim_loss


# ----------------------------------------------------------------------------
# Pure-JAX reference (lax depthwise conv, f32) for a sanity check.
# ----------------------------------------------------------------------------
def combined_loss_ref(pred, target):
    B, C, H, W = pred.shape
    pred = pred.astype(jnp.float32)
    target = target.astype(jnp.float32)

    kern = jnp.tile(jnp.asarray(WIN2D)[None, None], (C, 1, 1, 1))  # (C,1,K,K)

    def dw(x):
        return lax.conv_general_dilated(
            x, kern, window_strides=(1, 1), padding=[(PAD, PAD), (PAD, PAD)],
            dimension_numbers=("NCHW", "OIHW", "NCHW"), feature_group_count=C)

    mu1, mu2 = dw(pred), dw(target)
    mu1_sq, mu2_sq, mu1_mu2 = mu1 * mu1, mu2 * mu2, mu1 * mu2
    sigma1_sq = dw(pred * pred) - mu1_sq
    sigma2_sq = dw(target * target) - mu2_sq
    sigma12 = dw(pred * target) - mu1_mu2
    ssim_map = ((2 * mu1_mu2 + C1) * (2 * sigma12 + C2)) / (
        (mu1_sq + mu2_sq + C1) * (sigma1_sq + sigma2_sq + C2))
    ssim_loss = 1.0 - jnp.mean(ssim_map)

    l1_val = jnp.mean(jnp.abs(pred - target))

    p2 = pred.reshape(B, -1)
    t2 = target.reshape(B, -1)
    pc = p2 - jnp.mean(p2, axis=1, keepdims=True)
    tc = t2 - jnp.mean(t2, axis=1, keepdims=True)
    num = jnp.sum(pc * tc, axis=1)
    den = jnp.sqrt(jnp.sum(pc * pc, axis=1) * jnp.sum(tc * tc, axis=1))
    npcc_val = -jnp.mean(num / den)

    return ALPHA * npcc_val + BETA * l1_val + GAMMA * ssim_loss


if __name__ == "__main__":
    key = jax.random.PRNGKey(0)
    k1, k2 = jax.random.split(key)
    B, C, H, W = 2, 4, 16, 32          # C*W = 128 -> fully lane-dense blocks
    pred = jax.random.uniform(k1, (B, C, H, W), dtype=jnp.float32)
    target = jax.random.uniform(k2, (B, C, H, W), dtype=jnp.float32)

    out = combined_loss(pred, target)
    jax.block_until_ready(out)

    ref = combined_loss_ref(pred, target)
    # bf16 conv matmuls perturb only the SSIM term (~1e-3); NPCC/L1 paths are f32.
    assert abs(float(out) - float(ref)) < 3e-3, (float(out), float(ref))
    print("KERNEL_OK")
</pallas_src>

<mosaic_0001>
module attributes {stable_mosaic.version = 11 : i64} {
  func.func @_combined_loss_kernel(%arg0: i32, %arg1: memref<1x16x128xf32, #tpu.memory_space<vmem>>, %arg2: memref<1x16x128xf32, #tpu.memory_space<vmem>>, %arg3: memref<16x16xbf16, #tpu.memory_space<vmem>>, %arg4: memref<128x128xbf16, #tpu.memory_space<vmem>>, %arg5: memref<1x8x128xf32, #tpu.memory_space<vmem>>) attributes {dimension_semantics = [#tpu.dimension_semantics<parallel>], iteration_bounds = array<i64: 2>, scalar_prefetch = 0 : i64, scratch_operands = 0 : i64, tpu.core_type = #tpu.core_type<tc>, window_params = [{transform_indices = @transform_0, window_bounds = array<i64: 1, 16, 128>}, {transform_indices = @transform_1, window_bounds = array<i64: 1, 16, 128>}, {pipeline_mode = #tpu.pipeline_mode<synchronous>, transform_indices = @transform_2, window_bounds = array<i64: 16, 16>}, {pipeline_mode = #tpu.pipeline_mode<synchronous>, transform_indices = @transform_3, window_bounds = array<i64: 128, 128>}, {transform_indices = @transform_4, window_bounds = array<i64: 1, 8, 128>}]} {
    %c0 = arith.constant 0 : index
    %c0_0 = arith.constant 0 : index
    %c0_1 = arith.constant 0 : index
    %0 = vector.load %arg1[%c0, %c0_0, %c0_1] : memref<1x16x128xf32, #tpu.memory_space<vmem>>, vector<1x16x128xf32>
    %1 = vector.shape_cast %0 : vector<1x16x128xf32> to vector<16x128xf32>
    %c0_2 = arith.constant 0 : index
    %c0_3 = arith.constant 0 : index
    %c0_4 = arith.constant 0 : index
    %2 = vector.load %arg2[%c0_2, %c0_3, %c0_4] : memref<1x16x128xf32, #tpu.memory_space<vmem>>, vector<1x16x128xf32>
    %3 = vector.shape_cast %2 : vector<1x16x128xf32> to vector<16x128xf32>
    %c0_5 = arith.constant 0 : index
    %c0_6 = arith.constant 0 : index
    %4 = vector.load %arg3[%c0_5, %c0_6] : memref<16x16xbf16, #tpu.memory_space<vmem>>, vector<16x16xbf16>
    %c0_7 = arith.constant 0 : index
    %c0_8 = arith.constant 0 : index
    %5 = vector.load %arg4[%c0_7, %c0_8] : memref<128x128xbf16, #tpu.memory_space<vmem>>, vector<128x128xbf16>
    %6 = arith.subf %1, %3 : vector<16x128xf32>
    %7 = math.absf %6 : vector<16x128xf32>
    %8 = vector.shape_cast %7 : vector<16x128xf32> to vector<1x16x128xf32>
    %cst = arith.constant dense<0.000000e+00> : vector<1xf32>
    %9 = vector.multi_reduction <add>, %8, %cst [1, 2] : vector<1x16x128xf32> to vector<1xf32>
    %10 = vector.shape_cast %9 : vector<1xf32> to vector<1x1x1xf32>
    %11 = vector.extract %10[0, 0, 0] : f32 from vector<1x1x1xf32>
    %12 = vector.shape_cast %1 : vector<16x128xf32> to vector<1x16x128xf32>
    %cst_9 = arith.constant dense<0.000000e+00> : vector<1xf32>
    %13 = vector.multi_reduction <add>, %12, %cst_9 [1, 2] : vector<1x16x128xf32> to vector<1xf32>
    %14 = vector.shape_cast %13 : vector<1xf32> to vector<1x1x1xf32>
    %15 = vector.extract %14[0, 0, 0] : f32 from vector<1x1x1xf32>
    %16 = vector.shape_cast %3 : vector<16x128xf32> to vector<1x16x128xf32>
    %cst_10 = arith.constant dense<0.000000e+00> : vector<1xf32>
    %17 = vector.multi_reduction <add>, %16, %cst_10 [1, 2] : vector<1x16x128xf32> to vector<1xf32>
    %18 = vector.shape_cast %17 : vector<1xf32> to vector<1x1x1xf32>
    %19 = vector.extract %18[0, 0, 0] : f32 from vector<1x1x1xf32>
    %20 = arith.mulf %1, %1 : vector<16x128xf32>
    %21 = vector.shape_cast %20 : vector<16x128xf32> to vector<1x16x128xf32>
    %cst_11 = arith.constant dense<0.000000e+00> : vector<1xf32>
    %22 = vector.multi_reduction <add>, %21, %cst_11 [1, 2] : vector<1x16x128xf32> to vector<1xf32>
    %23 = vector.shape_cast %22 : vector<1xf32> to vector<1x1x1xf32>
    %24 = vector.extract %23[0, 0, 0] : f32 from vector<1x1x1xf32>
    %25 = arith.mulf %3, %3 : vector<16x128xf32>
    %26 = vector.shape_cast %25 : vector<16x128xf32> to vector<1x16x128xf32>
    %cst_12 = arith.constant dense<0.000000e+00> : vector<1xf32>
    %27 = vector.multi_reduction <add>, %26, %cst_12 [1, 2] : vector<1x16x128xf32> to vector<1xf32>
    %28 = vector.shape_cast %27 : vector<1xf32> to vector<1x1x1xf32>
    %29 = vector.extract %28[0, 0, 0] : f32 from vector<1x1x1xf32>
    %30 = arith.mulf %1, %3 : vector<16x128xf32>
    %31 = vector.shape_cast %30 : vector<16x128xf32> to vector<1x16x128xf32>
    %cst_13 = arith.constant dense<0.000000e+00> : vector<1xf32>
    %32 = vector.multi_reduction <add>, %31, %cst_13 [1, 2] : vector<1x16x128xf32> to vector<1xf32>
    %33 = vector.shape_cast %32 : vector<1xf32> to vector<1x1x1xf32>
    %34 = vector.extract %33[0, 0, 0] : f32 from vector<1x1x1xf32>
    %35 = arith.truncf %1 : vector<16x128xf32> to vector<16x128xbf16>
    %cst_14 = arith.constant dense<0.000000e+00> : vector<16x128xf32>
    %36 = tpu.matmul %4, %35, %cst_14 {dimension_numbers = #tpu.dot_dimension_numbers<[1], [0], [0], [1], [0, 0, 1, 1], [], []>} : vector<16x16xbf16>, vector<16x128xbf16>, vector<16x128xf32> -> vector<16x128xf32>
    %37 = arith.truncf %36 : vector<16x128xf32> to vector<16x128xbf16>
    %cst_15 = arith.constant dense<0.000000e+00> : vector<16x128xf32>
    %38 = tpu.matmul %37, %5, %cst_15 {dimension_numbers = #tpu.dot_dimension_numbers<[1], [0], [0], [1], [0, 0, 1, 1], [], []>} : vector<16x128xbf16>, vector<128x128xbf16>, vector<16x128xf32> -> vector<16x128xf32>
    %39 = arith.truncf %3 : vector<16x128xf32> to vector<16x128xbf16>
    %cst_16 = arith.constant dense<0.000000e+00> : vector<16x128xf32>
    %40 = tpu.matmul %4, %39, %cst_16 {dimension_numbers = #tpu.dot_dimension_numbers<[1], [0], [0], [1], [0, 0, 1, 1], [], []>} : vector<16x16xbf16>, vector<16x128xbf16>, vector<16x128xf32> -> vector<16x128xf32>
    %41 = arith.truncf %40 : vector<16x128xf32> to vector<16x128xbf16>
    %cst_17 = arith.constant dense<0.000000e+00> : vector<16x128xf32>
    %42 = tpu.matmul %41, %5, %cst_17 {dimension_numbers = #tpu.dot_dimension_numbers<[1], [0], [0], [1], [0, 0, 1, 1], [], []>} : vector<16x128xbf16>, vector<128x128xbf16>, vector<16x128xf32> -> vector<16x128xf32>
    %43 = arith.mulf %38, %38 : vector<16x128xf32>
    %44 = arith.mulf %42, %42 : vector<16x128xf32>
    %45 = arith.mulf %38, %42 : vector<16x128xf32>
    %46 = arith.truncf %20 : vector<16x128xf32> to vector<16x128xbf16>
    %cst_18 = arith.constant dense<0.000000e+00> : vector<16x128xf32>
    %47 = tpu.matmul %4, %46, %cst_18 {dimension_numbers = #tpu.dot_dimension_numbers<[1], [0], [0], [1], [0, 0, 1, 1], [], []>} : vector<16x16xbf16>, vector<16x128xbf16>, vector<16x128xf32> -> vector<16x128xf32>
    %48 = arith.truncf %47 : vector<16x128xf32> to vector<16x128xbf16>
    %cst_19 = arith.constant dense<0.000000e+00> : vector<16x128xf32>
    %49 = tpu.matmul %48, %5, %cst_19 {dimension_numbers = #tpu.dot_dimension_numbers<[1], [0], [0], [1], [0, 0, 1, 1], [], []>} : vector<16x128xbf16>, vector<128x128xbf16>, vector<16x128xf32> -> vector<16x128xf32>
    %50 = arith.subf %49, %43 : vector<16x128xf32>
    %51 = arith.truncf %25 : vector<16x128xf32> to vector<16x128xbf16>
    %cst_20 = arith.constant dense<0.000000e+00> : vector<16x128xf32>
    %52 = tpu.matmul %4, %51, %cst_20 {dimension_numbers = #tpu.dot_dimension_numbers<[1], [0], [0], [1], [0, 0, 1, 1], [], []>} : vector<16x16xbf16>, vector<16x128xbf16>, vector<16x128xf32> -> vector<16x128xf32>
    %53 = arith.truncf %52 : vector<16x128xf32> to vector<16x128xbf16>
    %cst_21 = arith.constant dense<0.000000e+00> : vector<16x128xf32>
    %54 = tpu.matmul %53, %5, %cst_21 {dimension_numbers = #tpu.dot_dimension_numbers<[1], [0], [0], [1], [0, 0, 1, 1], [], []>} : vector<16x128xbf16>, vector<128x128xbf16>, vector<16x128xf32> -> vector<16x128xf32>
    %55 = arith.subf %54, %44 : vector<16x128xf32>
    %56 = arith.truncf %30 : vector<16x128xf32> to vector<16x128xbf16>
    %cst_22 = arith.constant dense<0.000000e+00> : vector<16x128xf32>
    %57 = tpu.matmul %4, %56, %cst_22 {dimension_numbers = #tpu.dot_dimension_numbers<[1], [0], [0], [1], [0, 0, 1, 1], [], []>} : vector<16x16xbf16>, vector<16x128xbf16>, vector<16x128xf32> -> vector<16x128xf32>
    %58 = arith.truncf %57 : vector<16x128xf32> to vector<16x128xbf16>
    %cst_23 = arith.constant dense<0.000000e+00> : vector<16x128xf32>
    %59 = tpu.matmul %58, %5, %cst_23 {dimension_numbers = #tpu.dot_dimension_numbers<[1], [0], [0], [1], [0, 0, 1, 1], [], []>} : vector<16x128xbf16>, vector<128x128xbf16>, vector<16x128xf32> -> vector<16x128xf32>
    %60 = arith.subf %59, %45 : vector<16x128xf32>
    %cst_24 = arith.constant 2.000000e+00 : f32
    %61 = vector.broadcast %cst_24 : f32 to vector<16x128xf32>
    %62 = arith.mulf %61, %45 : vector<16x128xf32>
    %cst_25 = arith.constant 9.99999974E-5 : f32
    %63 = vector.broadcast %cst_25 : f32 to vector<16x128xf32>
    %64 = arith.addf %62, %63 : vector<16x128xf32>
    %cst_26 = arith.constant 2.000000e+00 : f32
    %65 = vector.broadcast %cst_26 : f32 to vector<16x128xf32>
    %66 = arith.mulf %65, %60 : vector<16x128xf32>
    %cst_27 = arith.constant 8.99999984E-4 : f32
    %67 = vector.broadcast %cst_27 : f32 to vector<16x128xf32>
    %68 = arith.addf %66, %67 : vector<16x128xf32>
    %69 = arith.mulf %64, %68 : vector<16x128xf32>
    %70 = arith.addf %43, %44 : vector<16x128xf32>
    %cst_28 = arith.constant 9.99999974E-5 : f32
    %71 = vector.broadcast %cst_28 : f32 to vector<16x128xf32>
    %72 = arith.addf %70, %71 : vector<16x128xf32>
    %73 = arith.addf %50, %55 : vector<16x128xf32>
    %cst_29 = arith.constant 8.99999984E-4 : f32
    %74 = vector.broadcast %cst_29 : f32 to vector<16x128xf32>
    %75 = arith.addf %73, %74 : vector<16x128xf32>
    %76 = arith.mulf %72, %75 : vector<16x128xf32>
    %77 = arith.divf %69, %76 : vector<16x128xf32>
    %78 = vector.shape_cast %77 : vector<16x128xf32> to vector<1x16x128xf32>
    %cst_30 = arith.constant dense<0.000000e+00> : vector<1xf32>
    %79 = vector.multi_reduction <add>, %78, %cst_30 [1, 2] : vector<1x16x128xf32> to vector<1xf32>
    %80 = vector.shape_cast %79 : vector<1xf32> to vector<1x1x1xf32>
    %81 = vector.extract %80[0, 0, 0] : f32 from vector<1x1x1xf32>
    %82 = tpu.iota {dimensions = array<i32: 0>} : vector<8x128xi32>
    %cst_31 = arith.constant 0.000000e+00 : f32
    %83 = vector.broadcast %cst_31 : f32 to vector<8x128xf32>
    %c0_i32 = arith.constant 0 : i32
    %84 = vector.broadcast %c0_i32 : i32 to vector<8x128xi32>
    %85 = arith.cmpi eq, %82, %84 : vector<8x128xi32>
    %86 = vector.broadcast %81 : f32 to vector<8x128xf32>
    %87 = arith.select %85, %86, %83 : vector<8x128xi1>, vector<8x128xf32>
    %c1_i32 = arith.constant 1 : i32
    %88 = vector.broadcast %c1_i32 : i32 to vector<8x128xi32>
    %89 = arith.cmpi eq, %82, %88 : vector<8x128xi32>
    %90 = vector.broadcast %11 : f32 to vector<8x128xf32>
    %91 = arith.select %89, %90, %87 : vector<8x128xi1>, vector<8x128xf32>
    %c2_i32 = arith.constant 2 : i32
    %92 = vector.broadcast %c2_i32 : i32 to vector<8x128xi32>
    %93 = arith.cmpi eq, %82, %92 : vector<8x128xi32>
    %94 = vector.broadcast %15 : f32 to vector<8x128xf32>
    %95 = arith.select %93, %94, %91 : vector<8x128xi1>, vector<8x128xf32>
    %c3_i32 = arith.constant 3 : i32
    %96 = vector.broadcast %c3_i32 : i32 to vector<8x128xi32>
    %97 = arith.cmpi eq, %82, %96 : vector<8x128xi32>
    %98 = vector.broadcast %19 : f32 to vector<8x128xf32>
    %99 = arith.select %97, %98, %95 : vector<8x128xi1>, vector<8x128xf32>
    %c4_i32 = arith.constant 4 : i32
    %100 = vector.broadcast %c4_i32 : i32 to vector<8x128xi32>
    %101 = arith.cmpi eq, %82, %100 : vector<8x128xi32>
    %102 = vector.broadcast %24 : f32 to vector<8x128xf32>
    %103 = arith.select %101, %102, %99 : vector<8x128xi1>, vector<8x128xf32>
    %c5_i32 = arith.constant 5 : i32
    %104 = vector.broadcast %c5_i32 : i32 to vector<8x128xi32>
    %105 = arith.cmpi eq, %82, %104 : vector<8x128xi32>
    %106 = vector.broadcast %29 : f32 to vector<8x128xf32>
    %107 = arith.select %105, %106, %103 : vector<8x128xi1>, vector<8x128xf32>
    %c6_i32 = arith.constant 6 : i32
    %108 = vector.broadcast %c6_i32 : i32 to vector<8x128xi32>
    %109 = arith.cmpi eq, %82, %108 : vector<8x128xi32>
    %110 = vector.broadcast %34 : f32 to vector<8x128xf32>
    %111 = arith.select %109, %110, %107 : vector<8x128xi1>, vector<8x128xf32>
    %c0_32 = arith.constant 0 : index
    %c0_33 = arith.constant 0 : index
    %c0_34 = arith.constant 0 : index
    %112 = vector.load %arg5[%c0_32, %c0_33, %c0_34] : memref<1x8x128xf32, #tpu.memory_space<vmem>>, vector<1x8x128xf32>
    %113 = vector.shape_cast %112 : vector<1x8x128xf32> to vector<8x128xf32>
    %114 = vector.shape_cast %111 : vector<8x128xf32> to vector<1x8x128xf32>
    tpu.vector_store %arg5[%c0_32, %c0_33, %c0_34], %114 {strides = array<i32>} : memref<1x8x128xf32, #tpu.memory_space<vmem>>, vector<1x8x128xf32>,
    return
  }
  func.func @transform_0(%arg0: i32) -> (i32, i32, i32) {
    %c0_i32 = arith.constant 0 : i32
    %c0_i32_0 = arith.constant 0 : i32
    %c0_i32_1 = arith.constant 0 : i32
    return %arg0, %c0_i32, %c0_i32_0 : i32, i32, i32
  }
  func.func @transform_1(%arg0: i32) -> (i32, i32, i32) {
    %c0_i32 = arith.constant 0 : i32
    %c0_i32_0 = arith.constant 0 : i32
    %c0_i32_1 = arith.constant 0 : i32
    return %arg0, %c0_i32, %c0_i32_0 : i32, i32, i32
  }
  func.func @transform_2(%arg0: i32) -> (i32, i32) {
    %c0_i32 = arith.constant 0 : i32
    %c0_i32_0 = arith.constant 0 : i32
    %c0_i32_1 = arith.constant 0 : i32
    return %c0_i32, %c0_i32_0 : i32, i32
  }
  func.func @transform_3(%arg0: i32) -> (i32, i32) {
    %c0_i32 = arith.constant 0 : i32
    %c0_i32_0 = arith.constant 0 : i32
    %c0_i32_1 = arith.constant 0 : i32
    return %c0_i32, %c0_i32_0 : i32, i32
  }
  func.func @transform_4(%arg0: i32) -> (i32, i32, i32) {
    %c0_i32 = arith.constant 0 : i32
    %c0_i32_0 = arith.constant 0 : i32
    %c0_i32_1 = arith.constant 0 : i32
    return %arg0, %c0_i32, %c0_i32_0 : i32, i32, i32
  }
}

</mosaic_0001>

<llo_original>
// kernel: tpu_custom_call.1
$region0: #{tpu_custom_call.1}
  #allocation0 [shape = 'u32[]', space=smem, size = 0x4, offset = 0x4, fixed_abs, tag = 'smem constant byte address 0x4 - core index']
  #allocation1 [shape = 'u32[144,128]{1,0:T(1,128)}', space=vmem, size = 0x12000, scoped, tag = 'internal scratch']
  %s0 = inlined_call_operand.hbm [shape: f32[2,16,128], index: 0, kind: input, shape index: {}]
  %s1 = inlined_call_operand.hbm [shape: f32[2,16,128], index: 1, kind: input, shape index: {}]
  %s2 = inlined_call_operand.hbm [shape: bf16[16,16], index: 2, kind: input, shape index: {}]
  %s3 = inlined_call_operand.hbm [shape: bf16[128,128], index: 3, kind: input, shape index: {}]
  %s4 = inlined_call_operand.hbm [shape: f32[2,8,128], index: 4, kind: output, shape index: {}]
  %s5 = sld [smem:[#allocation0]]
  $region65: #{tpu_custom_call.1} parent=0
    _
  %s7 = ssub.s32 1, %s5
  %s8 = scalar_select 0, %s7, %s5
  $region1: #{tpu_custom_call.1} parent=0
    #allocation2 [shape = 'u8[16384]{0}', space=vmem, size = 0x4000, scoped, tag = 'input window, operand 0']
    #allocation3 [shape = 's32[2]{0}', space=sflag, size = 0x8, scoped, tag = 'scoped memory for tpu_custom_call.1']
    #allocation4 [shape = 's32[2]{0}', space=sflag, size = 0x8, scoped, tag = 'scoped memory for tpu_custom_call.1']
    #allocation5 [shape = 'u8[16384]{0}', space=vmem, size = 0x4000, scoped, tag = 'input window, operand 1']
    #allocation6 [shape = 's32[2]{0}', space=sflag, size = 0x8, scoped, tag = 'scoped memory for tpu_custom_call.1']
    #allocation7 [shape = 'u8[4096]{0}', space=vmem, size = 0x1000, scoped, tag = 'input window, operand 2, single buffered']
    #allocation8 [shape = 'u8[32768]{0}', space=vmem, size = 0x8000, scoped, tag = 'input window, operand 3, single buffered']
    #allocation9 [shape = 's32[1]{0}', space=sflag, size = 0x4, scoped, tag = 'scoped memory for tpu_custom_call.1']
    #allocation10 [shape = 'u8[8192]{0}', space=vmem, size = 0x2000, scoped, tag = 'output window, operand 0']
    %9 = vsyncpa [#allocation3], 0
    %s10 = scalar_lea.sflag [#allocation3], 1
    %11 = vsyncpa %s10, 0
    %12 = vsyncpa [#allocation6], 0
    %s13 = scalar_lea.sflag [#allocation6], 1
    %14 = vsyncpa %s13, 0
    %15 = vsyncpa [#allocation9], 0
    %16 = vsyncpa [#allocation4], 0
    %s17 = scalar_lea.sflag [#allocation4], 1
    %18 = vsyncpa %s17, 0
    loop: start=0, step=1, limit=4
    $region2: #{tpu_custom_call.1} parent=1 // loop_pre_header
      _
    $region3: #{tpu_custom_call.1} parent=1 // loop_header
      %s20 = sphi 0, %s24
      %p21 = scmp.ge.s32.totalorder %s20, 4
      %s30 = sphi 0, %s32
      %s33 = sphi 0, %s30
      %s34 = sphi 0, %s33
      %s50 = sphi 0, %s34
      %s56 = sphi 0, %s58
      %s59 = sphi 0, %s56
      %s60 = sphi 0, %s59
      %s76 = sphi 0, %s60
      %s80 = sphi 0, %s80
      %s82 = sphi 0, %s80
      %s83 = sphi 0, %s82
      %s97 = sphi 0, %s83
      %s101 = sphi 0, %s101
      %s103 = sphi 0, %s101
      %s104 = sphi 0, %s103
      %s118 = sphi 0, %s104
      %s124 = sphi 0, %s126
      %s127 = sphi 0, %s124
      %s128 = sphi 0, %s127
      %s144 = sphi 0, %s128
    $region4: #{tpu_custom_call.1} parent=1 // loop_header_branch
      %23 = sbr.rel (%p21) target = $region8
    $region5: #{tpu_custom_call.1} parent=1 // loop_body
      %s25 = ssub.s32 %s20, 1
      %s26 = ssub.s32 %s20, 2
      %s27 = sadd.s32 %s20, 1
      %s28 = ssub.s32 %s20, %s27
      %p29 = scmp.eq.s32.totalorder %s28, 0
      %s31 = sadd.s32 %s30, 1
      %s32 = scalar_select %p29, %s30, %s31
      %p35 = pneg %p29
      %p36 = scmp.eq.s32.totalorder %s20, 1
      %p37 = por %p35, %p36
      %p38 = scmp.ne.s32.totalorder %s30, %s33
      %p39 = scmp.eq.s32.totalorder %s20, 0
      %p40 = por %p38, %p39
      %p41 = scmp.ne.s32.totalorder %s30, %s33
      %p42 = scmp.eq.s32.totalorder %s25, 1
      %p43 = por %p41, %p42
      %p44 = scmp.ne.s32.totalorder %s33, %s34
      %p45 = scmp.eq.s32.totalorder %s25, 0
      %p46 = por %p44, %p45
      %p47 = scmp.ne.s32.totalorder %s33, %s34
      %p48 = scmp.eq.s32.totalorder %s26, 1
      %p49 = por %p47, %p48
      %p51 = scmp.ne.s32.totalorder %s34, %s50
      %p52 = scmp.eq.s32.totalorder %s26, 0
      %p53 = por %p51, %p52
      %s54 = ssub.s32 %s20, %s27
      %p55 = scmp.eq.s32.totalorder %s54, 0
      %s57 = sadd.s32 %s56, 1
      %s58 = scalar_select %p55, %s56, %s57
      %p61 = pneg %p55
      %p62 = scmp.eq.s32.totalorder %s20, 1
      %p63 = por %p61, %p62
      %p64 = scmp.ne.s32.totalorder %s56, %s59
      %p65 = scmp.eq.s32.totalorder %s20, 0
      %p66 = por %p64, %p65
      %p67 = scmp.ne.s32.totalorder %s56, %s59
      %p68 = scmp.eq.s32.totalorder %s25, 1
      %p69 = por %p67, %p68
      %p70 = scmp.ne.s32.totalorder %s59, %s60
      %p71 = scmp.eq.s32.totalorder %s25, 0
      %p72 = por %p70, %p71
      %p73 = scmp.ne.s32.totalorder %s59, %s60
      %p74 = scmp.eq.s32.totalorder %s26, 1
      %p75 = por %p73, %p74
      %p77 = scmp.ne.s32.totalorder %s60, %s76
      %p78 = scmp.eq.s32.totalorder %s26, 0
      %p79 = por %p77, %p78
      %s81 = sadd.s32 %s80, 1
      %p84 = scmp.eq.s32.totalorder %s20, 1
      %p85 = scmp.ne.s32.totalorder %s80, %s82
      %p86 = scmp.eq.s32.totalorder %s20, 0
      %p87 = por %p85, %p86
      %p88 = scmp.ne.s32.totalorder %s80, %s82
      %p89 = scmp.eq.s32.totalorder %s25, 1
      %p90 = por %p88, %p89
      %p91 = scmp.ne.s32.totalorder %s82, %s83
      %p92 = scmp.eq.s32.totalorder %s25, 0
      %p93 = por %p91, %p92
      %p94 = scmp.ne.s32.totalorder %s82, %s83
      %p95 = scmp.eq.s32.totalorder %s26, 1
      %p96 = por %p94, %p95
      %p98 = scmp.ne.s32.totalorder %s83, %s97
      %p99 = scmp.eq.s32.totalorder %s26, 0
      %p100 = por %p98, %p99
      %s102 = sadd.s32 %s101, 1
      %p105 = scmp.eq.s32.totalorder %s20, 1
      %p106 = scmp.ne.s32.totalorder %s101, %s103
      %p107 = scmp.eq.s32.totalorder %s20, 0
      %p108 = por %p106, %p107
      %p109 = scmp.ne.s32.totalorder %s101, %s103
      %p110 = scmp.eq.s32.totalorder %s25, 1
      %p111 = por %p109, %p110
      %p112 = scmp.ne.s32.totalorder %s103, %s104
      %p113 = scmp.eq.s32.totalorder %s25, 0
      %p114 = por %p112, %p113
      %p115 = scmp.ne.s32.totalorder %s103, %s104
      %p116 = scmp.eq.s32.totalorder %s26, 1
      %p117 = por %p115, %p116
      %p119 = scmp.ne.s32.totalorder %s104, %s118
      %p120 = scmp.eq.s32.totalorder %s26, 0
      %p121 = por %p119, %p120
      %s122 = ssub.s32 %s20, %s27
      %p123 = scmp.eq.s32.totalorder %s122, 0
      %s125 = sadd.s32 %s124, 1
      %s126 = scalar_select %p123, %s124, %s125
      %p129 = pneg %p123
      %p130 = scmp.eq.s32.totalorder %s20, 1
      %p131 = por %p129, %p130
      %p132 = scmp.ne.s32.totalorder %s124, %s127
      %p133 = scmp.eq.s32.totalorder %s20, 0
      %p134 = por %p132, %p133
      %p135 = scmp.ne.s32.totalorder %s124, %s127
      %p136 = scmp.eq.s32.totalorder %s25, 1
      %p137 = por %p135, %p136
      %p138 = scmp.ne.s32.totalorder %s127, %s128
      %p139 = scmp.eq.s32.totalorder %s25, 0
      %p140 = por %p138, %p139
      %p141 = scmp.ne.s32.totalorder %s127, %s128
      %p142 = scmp.eq.s32.totalorder %s26, 1
      %p143 = por %p141, %p142
      %p145 = scmp.ne.s32.totalorder %s128, %s144
      %p146 = scmp.eq.s32.totalorder %s26, 0
      %p147 = por %p145, %p146
      %p148 = scmp.le.s32.totalorder 1, %s20
      %p149 = scmp.lt.s32.totalorder %s20, 3
      %p150 = pnand %p148, %p149
      %p151 = pneg %p150
      // Predicated region
      $region9: #{tpu_custom_call.1} parent=5 // pred_check
        _
      $region10: #{tpu_custom_call.1} parent=5 // pred_check_branch
        %153 = sbr.rel (%p150) target = $region12
      $region11: #{tpu_custom_call.1} parent=5 // pred_region
        %s154 = ssub.s32 %s20, 1
        // Predicated region
        $region13: #{tpu_custom_call.1} parent=11 // pred_check
          %p155 = pneg %p93
        $region14: #{tpu_custom_call.1} parent=11 // pred_check_branch
          %157 = sbr.rel (%p155) target = $region16
        $region15: #{tpu_custom_call.1} parent=11 // pred_region
          %s159 = ssub.s32 128, 128
          %160 = vsyncadd [#allocation6], %s159
          %s161 = sshll.u32 [#allocation7], 4
          %s162 = int_to_ptr.vmem [resolvable:$true] %s161
          %167 = dma.hbm_to_vmem [thread:$0]  %s2, 128, %s162, [#allocation6], 64, 64, 4
        $region16: #{tpu_custom_call.1} parent=11 // pred_fallthru
          _
        // Predicated region
        $region17: #{tpu_custom_call.1} parent=11 // pred_check
          %p168 = pneg %p114
        $region18: #{tpu_custom_call.1} parent=11 // pred_check_branch
          %170 = sbr.rel (%p168) target = $region20
        $region19: #{tpu_custom_call.1} parent=11 // pred_region
          %s172 = ssub.s32 1024, 1024
          %173 = vsyncadd [#allocation9], %s172
          %s174 = sshll.u32 [#allocation8], 4
          %s175 = int_to_ptr.vmem [resolvable:$true] %s174
          %180 = dma.hbm_to_vmem [thread:$0]  %s3, 1024, %s175, [#allocation9], 64, 64, 4
        $region20: #{tpu_custom_call.1} parent=11 // pred_fallthru
          _
      $region12: #{tpu_custom_call.1} parent=5 // pred_fallthru
        _
      %p181 = scmp.lt.s32.totalorder %s20, 2
      // Predicated region
      $region21: #{tpu_custom_call.1} parent=5 // pred_check
        %p182 = pneg %p181
      $region22: #{tpu_custom_call.1} parent=5 // pred_check_branch
        %184 = sbr.rel (%p182) target = $region24
      $region23: #{tpu_custom_call.1} parent=5 // pred_region
        // Predicated region
        $region25: #{tpu_custom_call.1} parent=23 // pred_check
          %p185 = pneg %p40
        $region26: #{tpu_custom_call.1} parent=23 // pred_check_branch
          %187 = sbr.rel (%p185) target = $region28
        $region27: #{tpu_custom_call.1} parent=23 // pred_region
          %s188 = sand.u32 %s30, 1
          %s189 = scalar_lea.sflag [#allocation3], %s188
          %s190 = sand.u32 %s30, 1
          %s191 = smul.addr %s190, 16
          %s192 = scalar_lea.vmem [#allocation2], %s191
          %s194 = ssub.s32 256, 256
          %195 = vsyncadd %s189, %s194
          %s196 = smul.addr %s20, 2
          %s197 = smul.addr %s196, 128
          %s198 = scalar_lea.hbm %s0, %s197
          %s199 = sshll.u32 %s192, 4
          %s200 = int_to_ptr.vmem [resolvable:$true] %s199
          %205 = dma.hbm_to_vmem [thread:$0]  %s198, 256, %s200, %s189, 128, 128, 8
        $region28: #{tpu_custom_call.1} parent=23 // pred_fallthru
          _
        // Predicated region
        $region29: #{tpu_custom_call.1} parent=23 // pred_check
          %p206 = pneg %p66
        $region30: #{tpu_custom_call.1} parent=23 // pred_check_branch
          %208 = sbr.rel (%p206) target = $region32
        $region31: #{tpu_custom_call.1} parent=23 // pred_region
          %s209 = sand.u32 %s20, 1
          %s210 = scalar_lea.sflag [#allocation6], %s209
          %s211 = sand.u32 %s56, 1
          %s212 = smul.addr %s211, 16
          %s213 = scalar_lea.vmem [#allocation5], %s212
          %s215 = ssub.s32 256, 256
          %216 = vsyncadd %s210, %s215
          %s217 = smul.addr %s20, 2
          %s218 = smul.addr %s217, 128
          %s219 = scalar_lea.hbm %s1, %s218
          %s220 = sshll.u32 %s213, 4
          %s221 = int_to_ptr.vmem [resolvable:$true] %s220
          %226 = dma.hbm_to_vmem [thread:$0]  %s219, 256, %s221, %s210, 128, 128, 8
        $region32: #{tpu_custom_call.1} parent=23 // pred_fallthru
          _
      $region24: #{tpu_custom_call.1} parent=5 // pred_fallthru
        _
      %p227 = scmp.le.s32.totalorder 1, %s20
      %p228 = scmp.lt.s32.totalorder %s20, 3
      %p229 = pnand %p227, %p228
      %p230 = pneg %p229
      // Predicated region
      $region33: #{tpu_custom_call.1} parent=5 // pred_check
        _
      $region34: #{tpu_custom_call.1} parent=5 // pred_check_branch
        %232 = sbr.rel (%p229) target = $region36
      $region35: #{tpu_custom_call.1} parent=5 // pred_region
        %s233 = ssub.s32 %s20, 1
        %s234 = sand.u32 %s33, 1
        %s235 = scalar_lea.sflag [#allocation3], %s234
        %s236 = sand.u32 %s33, 1
        %s237 = smul.addr %s236, 16
        %s238 = scalar_lea.vmem [#allocation2], %s237
        // Predicated region
        $region37: #{tpu_custom_call.1} parent=35 // pred_check
          %p239 = pneg %p46
        $region38: #{tpu_custom_call.1} parent=35 // pred_check_branch
          %241 = sbr.rel (%p239) target = $region40
        $region39: #{tpu_custom_call.1} parent=35 // pred_region
          %242 = dma.done %s235, 256
        $region40: #{tpu_custom_call.1} parent=35 // pred_fallthru
          _
        %s243 = sand.u32 %s25, 1
        %s244 = scalar_lea.sflag [#allocation6], %s243
        %s245 = sand.u32 %s59, 1
        %s246 = smul.addr %s245, 16
        %s247 = scalar_lea.vmem [#allocation5], %s246
        // Predicated region
        $region41: #{tpu_custom_call.1} parent=35 // pred_check
          %p248 = pneg %p72
        $region42: #{tpu_custom_call.1} parent=35 // pred_check_branch
          %250 = sbr.rel (%p248) target = $region44
        $region43: #{tpu_custom_call.1} parent=35 // pred_region
          %251 = dma.done %s244, 256
        $region44: #{tpu_custom_call.1} parent=35 // pred_fallthru
          _
        // Predicated region
        $region45: #{tpu_custom_call.1} parent=35 // pred_check
          %p252 = pneg %p93
        $region46: #{tpu_custom_call.1} parent=35 // pred_check_branch
          %254 = sbr.rel (%p252) target = $region48
        $region47: #{tpu_custom_call.1} parent=35 // pred_region
          %255 = dma.done [#allocation6], 128
        $region48: #{tpu_custom_call.1} parent=35 // pred_fallthru
          _
        // Predicated region
        $region49: #{tpu_custom_call.1} parent=35 // pred_check
          %p256 = pneg %p114
        $region50: #{tpu_custom_call.1} parent=35 // pred_check_branch
          %258 = sbr.rel (%p256) target = $region52
        $region51: #{tpu_custom_call.1} parent=35 // pred_region
          %259 = dma.done [#allocation9], 1024
        $region52: #{tpu_custom_call.1} parent=35 // pred_fallthru
          _
        %s260 = sand.u32 %s33, 1
        %s261 = scalar_lea.sflag [#allocation3], %s260
        %s262 = sand.u32 %s33, 1
        %s263 = smul.addr %s262, 16
        %s264 = scalar_lea.vmem [#allocation2], %s263
        %p265 = pneg %p46
        %p266 = pneg %p43
        %s267 = sand.u32 %s25, 1
        %s268 = scalar_lea.sflag [#allocation6], %s267
        %s269 = sand.u32 %s59, 1
        %s270 = smul.addr %s269, 16
        %s271 = scalar_lea.vmem [#allocation5], %s270
        %p272 = pneg %p72
        %p273 = pneg %p69
        %p274 = pneg %p93
        %p275 = pneg %p90
        %p276 = pneg %p114
        %p277 = pneg %p111
        %p278 = pneg %p140
        %p279 = pneg %p137
        %s280 = sand.u32 %s127, 1
        %s281 = scalar_lea.sflag [#allocation4], %s280
        %s282 = sand.u32 %s127, 1
        %s283 = smul.addr %s282, 8
        %s284 = scalar_lea.vmem [#allocation10], %s283
        %v286 = vld [vmem:[%s238] sm:$0xff]
        %v287 = vld [vmem:[%s238 + $0x8] sm:$0xff]
        %v288 = vld [vmem:[%s247] sm:$0xff]
        %v289 = vld [vmem:[%s247 + $0x8] sm:$0xff]
        %v290 = vld [vmem:[#allocation7] sm:$0xf]
        %v291 = vld [vmem:[#allocation7 + $0x4] sm:$0xf]
        %v292 = vld [vmem:[#allocation8] sm:$0xf]
        %v293 = vld [vmem:[#allocation8 + $0x4] sm:$0xf]
        %v294 = vld [vmem:[#allocation8 + $0x8] sm:$0xf]
        %v295 = vld [vmem:[#allocation8 + $0xc] sm:$0xf]
        %v296 = vld [vmem:[#allocation8 + $0x10] sm:$0xf]
        %v297 = vld [vmem:[#allocation8 + $0x14] sm:$0xf]
        %v298 = vld [vmem:[#allocation8 + $0x18] sm:$0xf]
        %v299 = vld [vmem:[#allocation8 + $0x1c] sm:$0xf]
        %v300 = vld [vmem:[#allocation8 + $0x20] sm:$0xf]
        %v301 = vld [vmem:[#allocation8 + $0x24] sm:$0xf]
        %v302 = vld [vmem:[#allocation8 + $0x28] sm:$0xf]
        %v303 = vld [vmem:[#allocation8 + $0x2c] sm:$0xf]
        %v304 = vld [vmem:[#allocation8 + $0x30] sm:$0xf]
        %v305 = vld [vmem:[#allocation8 + $0x34] sm:$0xf]
        %v306 = vld [vmem:[#allocation8 + $0x38] sm:$0xf]
        %v307 = vld [vmem:[#allocation8 + $0x3c] sm:$0xf]
        %v308 = vsub.f32 %v286, %v288
        %v309 = vsub.f32 %v287, %v289
        %v310 = vand.u32 2147483647, %v308
        %v311 = vand.u32 2147483647, %v309
        %v312 = vadd.f32 %v310, %v311
        %313 = vadd.xlane.f32.xlu0 %v312
        %v314 = vpop.xlane.xlu0 %313
        %v315 = vrot.slane %v314, 4
        %v316 = vadd.f32 %v314, %v315
        %v317 = vrot.slane %v316, 2
        %v318 = vadd.f32 %v316, %v317
        %v319 = vrot.slane %v318, 1
        %v320 = vadd.f32 %v318, %v319
        %s321 = vtos %v320
        %v322 = vadd.f32 %v286, %v287
        %323 = vadd.xlane.f32.xlu0 %v322
        %v324 = vpop.xlane.xlu0 %323
        %v325 = vrot.slane %v324, 4
        %v326 = vadd.f32 %v324, %v325
        %v327 = vrot.slane %v326, 2
        %v328 = vadd.f32 %v326, %v327
        %v329 = vrot.slane %v328, 1
        %v330 = vadd.f32 %v328, %v329
        %s331 = vtos %v330
        %v332 = vadd.f32 %v288, %v289
        %333 = vadd.xlane.f32.xlu0 %v332
        %v334 = vpop.xlane.xlu0 %333
        %v335 = vrot.slane %v334, 4
        %v336 = vadd.f32 %v334, %v335
        %v337 = vrot.slane %v336, 2
        %v338 = vadd.f32 %v336, %v337
        %v339 = vrot.slane %v338, 1
        %v340 = vadd.f32 %v338, %v339
        %s341 = vtos %v340
        %v342 = vmul.f32 %v286, %v286
        %v343 = vmul.f32 %v287, %v287
        %v344 = vadd.f32 %v342, %v343
        %345 = vadd.xlane.f32.xlu0 %v344
        %v346 = vpop.xlane.xlu0 %345
        %v347 = vrot.slane %v346, 4
        %v348 = vadd.f32 %v346, %v347
        %v349 = vrot.slane %v348, 2
        %v350 = vadd.f32 %v348, %v349
        %v351 = vrot.slane %v350, 1
        %v352 = vadd.f32 %v350, %v351
        %s353 = vtos %v352
        %v354 = vmul.f32 %v288, %v288
        %v355 = vmul.f32 %v289, %v289
        %v356 = vadd.f32 %v354, %v355
        %357 = vadd.xlane.f32.xlu0 %v356
        %v358 = vpop.xlane.xlu0 %357
        %v359 = vrot.slane %v358, 4
        %v360 = vadd.f32 %v358, %v359
        %v361 = vrot.slane %v360, 2
        %v362 = vadd.f32 %v360, %v361
        %v363 = vrot.slane %v362, 1
        %v364 = vadd.f32 %v362, %v363
        %s365 = vtos %v364
        %v366 = vmul.f32 %v286, %v288
        %v367 = vmul.f32 %v287, %v289
        %v368 = vadd.f32 %v366, %v367
        %369 = vadd.xlane.f32.xlu0 %v368
        %v370 = vpop.xlane.xlu0 %369
        %v371 = vrot.slane %v370, 4
        %v372 = vadd.f32 %v370, %v371
        %v373 = vrot.slane %v372, 2
        %v374 = vadd.f32 %v372, %v373
        %v375 = vrot.slane %v374, 1
        %v376 = vadd.f32 %v374, %v375
        %s377 = vtos %v376
        %v378 = vpack.c.bf16 %v287, %v286
        %v381 = vunpack.c.l.b16 %v290
        %v382 = vunpack.c.l.b16 %v291
        %v383 = vpack.c.b16 %v382, %v381
        %vm384 = vcmask 130048
        %v386 = vsel %vm384, %v383, 0
        %388 = vmatprep.subr.bf16.mxu0 0
        %389 = vmatpush1.bf16.msra.mxu0 %v378
        %390 = vmatprep.subr.bf16.mxu0 0
        %391 = vmatpush1.bf16.msra.mxu0 0
        %392 = vmatprep.subr.bf16.mxu0 0
        %393 = vmatpush1.bf16.msra.mxu0 0
        %394 = vmatprep.subr.bf16.mxu0 0
        %395 = vmatpush1.bf16.msra.mxu0 0
        %396 = vmatprep.subr.bf16.mxu0 0
        %397 = vmatpush1.bf16.msra.mxu0 0
        %398 = vmatprep.subr.bf16.mxu0 0
        %399 = vmatpush1.bf16.msra.mxu0 0
        %400 = vmatprep.subr.bf16.mxu0 0
        %401 = vmatpush1.bf16.msra.mxu0 0
        %402 = vmatprep.subr.bf16.mxu0 0
        %403 = vmatpush1.bf16.msra.mxu0 0
        %404 = vmatprep.subr.bf16.mxu0 0
        %405 = vmatpush1.bf16.msra.mxu0 0
        %406 = vmatprep.subr.bf16.mxu0 0
        %407 = vmatpush1.bf16.msra.mxu0 0
        %408 = vmatprep.subr.bf16.mxu0 0
        %409 = vmatpush1.bf16.msra.mxu0 0
        %410 = vmatprep.subr.bf16.mxu0 0
        %411 = vmatpush1.bf16.msra.mxu0 0
        %412 = vmatprep.subr.bf16.mxu0 0
        %413 = vmatpush1.bf16.msra.mxu0 0
        %414 = vmatprep.subr.bf16.mxu0 0
        %415 = vmatpush1.bf16.msra.mxu0 0
        %416 = vmatprep.subr.bf16.mxu0 0
        %417 = vmatpush1.bf16.msra.mxu0 0
        %418 = vmatprep.subr.bf16.mxu0 0
        %419 = vmatpush1.bf16.msra.mxu0 0
        %420 = vmatprep.mubr.bf16.mxu0 0
        %421 = vmatmul.mubr.bf16.gmra.mrb[0].mxu0 %v386
        %v422 = vpop.f32.mrb[0].mxu0
        %v423 = vadd.f32 0.0, %v422
        %v424 = vpop.f32.mrb[0].mxu0
        %v425 = vpop.f32.mrb[0].mxu0
        %v426 = vadd.f32 0.0, %v425
        %v427 = vpop.f32.mrb[0].mxu0
        %428 = vdwg.mxu0
        %v429 = vpack.c.bf16 %v426, %v423
        %v446 = vunpack.c.l.b16 %v292
        %v447 = vunpack.c.l.b16 %v293
        %v448 = vunpack.c.l.b16 %v294
        %v449 = vunpack.c.l.b16 %v295
        %v450 = vunpack.c.l.b16 %v296
        %v451 = vunpack.c.l.b16 %v297
        %v452 = vunpack.c.l.b16 %v298
        %v453 = vunpack.c.l.b16 %v299
        %v454 = vunpack.c.l.b16 %v300
        %v455 = vunpack.c.l.b16 %v301
        %v456 = vunpack.c.l.b16 %v302
        %v457 = vunpack.c.l.b16 %v303
        %v458 = vunpack.c.l.b16 %v304
        %v459 = vunpack.c.l.b16 %v305
        %v460 = vunpack.c.l.b16 %v306
        %v461 = vunpack.c.l.b16 %v307
        %v462 = vpack.c.b16 %v447, %v446
        %v463 = vpack.c.b16 %v449, %v448
        %v464 = vpack.c.b16 %v451, %v450
        %v465 = vpack.c.b16 %v453, %v452
        %v466 = vpack.c.b16 %v455, %v454
        %v467 = vpack.c.b16 %v457, %v456
        %v468 = vpack.c.b16 %v459, %v458
        %v469 = vpack.c.b16 %v461, %v460
        %478 = vmatprep.subr.bf16.mxu0 0
        %479 = vmatpush1.bf16.msra.mxu0 %v462
        %480 = vmatprep.subr.bf16.mxu0 0
        %481 = vmatpush1.bf16.msra.mxu0 %v463
        %482 = vmatprep.subr.bf16.mxu0 0
        %483 = vmatpush1.bf16.msra.mxu0 %v464
        %484 = vmatprep.subr.bf16.mxu0 0
        %485 = vmatpush1.bf16.msra.mxu0 %v465
        %486 = vmatprep.subr.bf16.mxu0 0
        %487 = vmatpush1.bf16.msra.mxu0 %v466
        %488 = vmatprep.subr.bf16.mxu0 0
        %489 = vmatpush1.bf16.msra.mxu0 %v467
        %490 = vmatprep.subr.bf16.mxu0 0
        %491 = vmatpush1.bf16.msra.mxu0 %v468
        %492 = vmatprep.subr.bf16.mxu0 0
        %493 = vmatpush1.bf16.msra.mxu0 %v469
        %494 = vmatprep.subr.bf16.mxu0 0
        %495 = vmatpush1.bf16.msra.mxu0 0
        %496 = vmatprep.subr.bf16.mxu0 0
        %497 = vmatpush1.bf16.msra.mxu0 0
        %498 = vmatprep.subr.bf16.mxu0 0
        %499 = vmatpush1.bf16.msra.mxu0 0
        %500 = vmatprep.subr.bf16.mxu0 0
        %501 = vmatpush1.bf16.msra.mxu0 0
        %502 = vmatprep.subr.bf16.mxu0 0
        %503 = vmatpush1.bf16.msra.mxu0 0
        %504 = vmatprep.subr.bf16.mxu0 0
        %505 = vmatpush1.bf16.msra.mxu0 0
        %506 = vmatprep.subr.bf16.mxu0 0
        %507 = vmatpush1.bf16.msra.mxu0 0
        %508 = vmatprep.subr.bf16.mxu0 0
        %509 = vmatpush1.bf16.msra.mxu0 0
        %510 = vmatprep.mubr.bf16.mxu0 0
        %511 = vmatmul.mubr.bf16.gmra.mrb[0].mxu0 %v429
        %v512 = vpop.f32.mrb[0].mxu0
        %v513 = vadd.f32 0.0, %v512
        %v514 = vpop.f32.mrb[0].mxu0
        %v515 = vpop.f32.mrb[0].mxu0
        %v516 = vadd.f32 0.0, %v515
        %v517 = vpop.f32.mrb[0].mxu0
        %518 = vdwg.mxu0
        %v519 = vpack.c.bf16 %v289, %v288
        %520 = vmatprep.subr.bf16.mxu0 0
        %521 = vmatpush1.bf16.msra.mxu0 %v519
        %522 = vmatprep.subr.bf16.mxu0 0
        %523 = vmatpush1.bf16.msra.mxu0 0
        %524 = vmatprep.subr.bf16.mxu0 0
        %525 = vmatpush1.bf16.msra.mxu0 0
        %526 = vmatprep.subr.bf16.mxu0 0
        %527 = vmatpush1.bf16.msra.mxu0 0
        %528 = vmatprep.subr.bf16.mxu0 0
        %529 = vmatpush1.bf16.msra.mxu0 0
        %530 = vmatprep.subr.bf16.mxu0 0
        %531 = vmatpush1.bf16.msra.mxu0 0
        %532 = vmatprep.subr.bf16.mxu0 0
        %533 = vmatpush1.bf16.msra.mxu0 0
        %534 = vmatprep.subr.bf16.mxu0 0
        %535 = vmatpush1.bf16.msra.mxu0 0
        %536 = vmatprep.subr.bf16.mxu0 0
        %537 = vmatpush1.bf16.msra.mxu0 0
        %538 = vmatprep.subr.bf16.mxu0 0
        %539 = vmatpush1.bf16.msra.mxu0 0
        %540 = vmatprep.subr.bf16.mxu0 0
        %541 = vmatpush1.bf16.msra.mxu0 0
        %542 = vmatprep.subr.bf16.mxu0 0
        %543 = vmatpush1.bf16.msra.mxu0 0
        %544 = vmatprep.subr.bf16.mxu0 0
        %545 = vmatpush1.bf16.msra.mxu0 0
        %546 = vmatprep.subr.bf16.mxu0 0
        %547 = vmatpush1.bf16.msra.mxu0 0
        %548 = vmatprep.subr.bf16.mxu0 0
        %549 = vmatpush1.bf16.msra.mxu0 0
        %550 = vmatprep.subr.bf16.mxu0 0
        %551 = vmatpush1.bf16.msra.mxu0 0
        %552 = vmatprep.mubr.bf16.mxu0 0
        %553 = vmatmul.mubr.bf16.gmra.mrb[0].mxu0 %v386
        %v554 = vpop.f32.mrb[0].mxu0
        %v555 = vadd.f32 0.0, %v554
        %v556 = vpop.f32.mrb[0].mxu0
        %v557 = vpop.f32.mrb[0].mxu0
        %v558 = vadd.f32 0.0, %v557
        %v559 = vpop.f32.mrb[0].mxu0
        %560 = vdwg.mxu0
        %v561 = vpack.c.bf16 %v558, %v555
        %562 = vmatprep.subr.bf16.mxu0 0
        %563 = vmatpush1.bf16.msra.mxu0 %v462
        %564 = vmatprep.subr.bf16.mxu0 0
        %565 = vmatpush1.bf16.msra.mxu0 %v463
        %566 = vmatprep.subr.bf16.mxu0 0
        %567 = vmatpush1.bf16.msra.mxu0 %v464
        %568 = vmatprep.subr.bf16.mxu0 0
        %569 = vmatpush1.bf16.msra.mxu0 %v465
        %570 = vmatprep.subr.bf16.mxu0 0
        %571 = vmatpush1.bf16.msra.mxu0 %v466
        %572 = vmatprep.subr.bf16.mxu0 0
        %573 = vmatpush1.bf16.msra.mxu0 %v467
        %574 = vmatprep.subr.bf16.mxu0 0
        %575 = vmatpush1.bf16.msra.mxu0 %v468
        %576 = vmatprep.subr.bf16.mxu0 0
        %577 = vmatpush1.bf16.msra.mxu0 %v469
        %578 = vmatprep.subr.bf16.mxu0 0
        %579 = vmatpush1.bf16.msra.mxu0 0
        %580 = vmatprep.subr.bf16.mxu0 0
        %581 = vmatpush1.bf16.msra.mxu0 0
        %582 = vmatprep.subr.bf16.mxu0 0
        %583 = vmatpush1.bf16.msra.mxu0 0
        %584 = vmatprep.subr.bf16.mxu0 0
        %585 = vmatpush1.bf16.msra.mxu0 0
        %586 = vmatprep.subr.bf16.mxu0 0
        %587 = vmatpush1.bf16.msra.mxu0 0
        %588 = vmatprep.subr.bf16.mxu0 0
        %589 = vmatpush1.bf16.msra.mxu0 0
        %590 = vmatprep.subr.bf16.mxu0 0
        %591 = vmatpush1.bf16.msra.mxu0 0
        %592 = vmatprep.subr.bf16.mxu0 0
        %593 = vmatpush1.bf16.msra.mxu0 0
        %594 = vmatprep.mubr.bf16.mxu0 0
        %595 = vmatmul.mubr.bf16.gmra.mrb[0].mxu0 %v561
        %v596 = vpop.f32.mrb[0].mxu0
        %v597 = vadd.f32 0.0, %v596
        %v598 = vpop.f32.mrb[0].mxu0
        %v599 = vpop.f32.mrb[0].mxu0
        %v600 = vadd.f32 0.0, %v599
        %v601 = vpop.f32.mrb[0].mxu0
        %602 = vdwg.mxu0
        %v603 = vmul.f32 %v513, %v513
        %v604 = vmul.f32 %v516, %v516
        %v605 = vmul.f32 %v597, %v597
        %v606 = vmul.f32 %v600, %v600
        %v607 = vmul.f32 %v513, %v597
        %v608 = vmul.f32 %v516, %v600
        %v609 = vpack.c.bf16 %v343, %v342
        %610 = vmatprep.subr.bf16.mxu0 0
        %611 = vmatpush1.bf16.msra.mxu0 %v609
        %612 = vmatprep.subr.bf16.mxu0 0
        %613 = vmatpush1.bf16.msra.mxu0 0
        %614 = vmatprep.subr.bf16.mxu0 0
        %615 = vmatpush1.bf16.msra.mxu0 0
        %616 = vmatprep.subr.bf16.mxu0 0
        %617 = vmatpush1.bf16.msra.mxu0 0
        %618 = vmatprep.subr.bf16.mxu0 0
        %619 = vmatpush1.bf16.msra.mxu0 0
        %620 = vmatprep.subr.bf16.mxu0 0
        %621 = vmatpush1.bf16.msra.mxu0 0
        %622 = vmatprep.subr.bf16.mxu0 0
        %623 = vmatpush1.bf16.msra.mxu0 0
        %624 = vmatprep.subr.bf16.mxu0 0
        %625 = vmatpush1.bf16.msra.mxu0 0
        %626 = vmatprep.subr.bf16.mxu0 0
        %627 = vmatpush1.bf16.msra.mxu0 0
        %628 = vmatprep.subr.bf16.mxu0 0
        %629 = vmatpush1.bf16.msra.mxu0 0
        %630 = vmatprep.subr.bf16.mxu0 0
        %631 = vmatpush1.bf16.msra.mxu0 0
        %632 = vmatprep.subr.bf16.mxu0 0
        %633 = vmatpush1.bf16.msra.mxu0 0
        %634 = vmatprep.subr.bf16.mxu0 0
        %635 = vmatpush1.bf16.msra.mxu0 0
        %636 = vmatprep.subr.bf16.mxu0 0
        %637 = vmatpush1.bf16.msra.mxu0 0
        %638 = vmatprep.subr.bf16.mxu0 0
        %639 = vmatpush1.bf16.msra.mxu0 0
        %640 = vmatprep.subr.bf16.mxu0 0
        %641 = vmatpush1.bf16.msra.mxu0 0
        %642 = vmatprep.mubr.bf16.mxu0 0
        %643 = vmatmul.mubr.bf16.gmra.mrb[0].mxu0 %v386
        %v644 = vpop.f32.mrb[0].mxu0
        %v645 = vadd.f32 0.0, %v644
        %v646 = vpop.f32.mrb[0].mxu0
        %v647 = vpop.f32.mrb[0].mxu0
        %v648 = vadd.f32 0.0, %v647
        %v649 = vpop.f32.mrb[0].mxu0
        %650 = vdwg.mxu0
        %v651 = vpack.c.bf16 %v648, %v645
        %652 = vmatprep.subr.bf16.mxu0 0
        %653 = vmatpush1.bf16.msra.mxu0 %v462
        %654 = vmatprep.subr.bf16.mxu0 0
        %655 = vmatpush1.bf16.msra.mxu0 %v463
        %656 = vmatprep.subr.bf16.mxu0 0
        %657 = vmatpush1.bf16.msra.mxu0 %v464
        %658 = vmatprep.subr.bf16.mxu0 0
        %659 = vmatpush1.bf16.msra.mxu0 %v465
        %660 = vmatprep.subr.bf16.mxu0 0
        %661 = vmatpush1.bf16.msra.mxu0 %v466
        %662 = vmatprep.subr.bf16.mxu0 0
        %663 = vmatpush1.bf16.msra.mxu0 %v467
        %664 = vmatprep.subr.bf16.mxu0 0
        %665 = vmatpush1.bf16.msra.mxu0 %v468
        %666 = vmatprep.subr.bf16.mxu0 0
        %667 = vmatpush1.bf16.msra.mxu0 %v469
        %668 = vmatprep.subr.bf16.mxu0 0
        %669 = vmatpush1.bf16.msra.mxu0 0
        %670 = vmatprep.subr.bf16.mxu0 0
        %671 = vmatpush1.bf16.msra.mxu0 0
        %672 = vmatprep.subr.bf16.mxu0 0
        %673 = vmatpush1.bf16.msra.mxu0 0
        %674 = vmatprep.subr.bf16.mxu0 0
        %675 = vmatpush1.bf16.msra.mxu0 0
        %676 = vmatprep.subr.bf16.mxu0 0
        %677 = vmatpush1.bf16.msra.mxu0 0
        %678 = vmatprep.subr.bf16.mxu0 0
        %679 = vmatpush1.bf16.msra.mxu0 0
        %680 = vmatprep.subr.bf16.mxu0 0
        %681 = vmatpush1.bf16.msra.mxu0 0
        %682 = vmatprep.subr.bf16.mxu0 0
        %683 = vmatpush1.bf16.msra.mxu0 0
        %684 = vmatprep.mubr.bf16.mxu0 0
        %685 = vmatmul.mubr.bf16.gmra.mrb[0].mxu0 %v651
        %v686 = vpop.f32.mrb[0].mxu0
        %v687 = vadd.f32 0.0, %v686
        %v688 = vpop.f32.mrb[0].mxu0
        %v689 = vpop.f32.mrb[0].mxu0
        %v690 = vadd.f32 0.0, %v689
        %v691 = vpop.f32.mrb[0].mxu0
        %692 = vdwg.mxu0
        %v693 = vsub.f32 %v687, %v603
        %v694 = vsub.f32 %v690, %v604
        %v695 = vpack.c.bf16 %v355, %v354
        %696 = vmatprep.subr.bf16.mxu0 0
        %697 = vmatpush1.bf16.msra.mxu0 %v695
        %698 = vmatprep.subr.bf16.mxu0 0
        %699 = vmatpush1.bf16.msra.mxu0 0
        %700 = vmatprep.subr.bf16.mxu0 0
        %701 = vmatpush1.bf16.msra.mxu0 0
        %702 = vmatprep.subr.bf16.mxu0 0
        %703 = vmatpush1.bf16.msra.mxu0 0
        %704 = vmatprep.subr.bf16.mxu0 0
        %705 = vmatpush1.bf16.msra.mxu0 0
        %706 = vmatprep.subr.bf16.mxu0 0
        %707 = vmatpush1.bf16.msra.mxu0 0
        %708 = vmatprep.subr.bf16.mxu0 0
        %709 = vmatpush1.bf16.msra.mxu0 0
        %710 = vmatprep.subr.bf16.mxu0 0
        %711 = vmatpush1.bf16.msra.mxu0 0
        %712 = vmatprep.subr.bf16.mxu0 0
        %713 = vmatpush1.bf16.msra.mxu0 0
        %714 = vmatprep.subr.bf16.mxu0 0
        %715 = vmatpush1.bf16.msra.mxu0 0
        %716 = vmatprep.subr.bf16.mxu0 0
        %717 = vmatpush1.bf16.msra.mxu0 0
        %718 = vmatprep.subr.bf16.mxu0 0
        %719 = vmatpush1.bf16.msra.mxu0 0
        %720 = vmatprep.subr.bf16.mxu0 0
        %721 = vmatpush1.bf16.msra.mxu0 0
        %722 = vmatprep.subr.bf16.mxu0 0
        %723 = vmatpush1.bf16.msra.mxu0 0
        %724 = vmatprep.subr.bf16.mxu0 0
        %725 = vmatpush1.bf16.msra.mxu0 0
        %726 = vmatprep.subr.bf16.mxu0 0
        %727 = vmatpush1.bf16.msra.mxu0 0
        %728 = vmatprep.mubr.bf16.mxu0 0
        %729 = vmatmul.mubr.bf16.gmra.mrb[0].mxu0 %v386
        %v730 = vpop.f32.mrb[0].mxu0
        %v731 = vadd.f32 0.0, %v730
        %v732 = vpop.f32.mrb[0].mxu0
        %v733 = vpop.f32.mrb[0].mxu0
        %v734 = vadd.f32 0.0, %v733
        %v735 = vpop.f32.mrb[0].mxu0
        %736 = vdwg.mxu0
        %v737 = vpack.c.bf16 %v734, %v731
        %738 = vmatprep.subr.bf16.mxu0 0
        %739 = vmatpush1.bf16.msra.mxu0 %v462
        %740 = vmatprep.subr.bf16.mxu0 0
        %741 = vmatpush1.bf16.msra.mxu0 %v463
        %742 = vmatprep.subr.bf16.mxu0 0
        %743 = vmatpush1.bf16.msra.mxu0 %v464
        %744 = vmatprep.subr.bf16.mxu0 0
        %745 = vmatpush1.bf16.msra.mxu0 %v465
        %746 = vmatprep.subr.bf16.mxu0 0
        %747 = vmatpush1.bf16.msra.mxu0 %v466
        %748 = vmatprep.subr.bf16.mxu0 0
        %749 = vmatpush1.bf16.msra.mxu0 %v467
        %750 = vmatprep.subr.bf16.mxu0 0
        %751 = vmatpush1.bf16.msra.mxu0 %v468
        %752 = vmatprep.subr.bf16.mxu0 0
        %753 = vmatpush1.bf16.msra.mxu0 %v469
        %754 = vmatprep.subr.bf16.mxu0 0
        %755 = vmatpush1.bf16.msra.mxu0 0
        %756 = vmatprep.subr.bf16.mxu0 0
        %757 = vmatpush1.bf16.msra.mxu0 0
        %758 = vmatprep.subr.bf16.mxu0 0
        %759 = vmatpush1.bf16.msra.mxu0 0
        %760 = vmatprep.subr.bf16.mxu0 0
        %761 = vmatpush1.bf16.msra.mxu0 0
        %762 = vmatprep.subr.bf16.mxu0 0
        %763 = vmatpush1.bf16.msra.mxu0 0
        %764 = vmatprep.subr.bf16.mxu0 0
        %765 = vmatpush1.bf16.msra.mxu0 0
        %766 = vmatprep.subr.bf16.mxu0 0
        %767 = vmatpush1.bf16.msra.mxu0 0
        %768 = vmatprep.subr.bf16.mxu0 0
        %769 = vmatpush1.bf16.msra.mxu0 0
        %770 = vmatprep.mubr.bf16.mxu0 0
        %771 = vmatmul.mubr.bf16.gmra.mrb[0].mxu0 %v737
        %v772 = vpop.f32.mrb[0].mxu0
        %v773 = vadd.f32 0.0, %v772
        %v774 = vpop.f32.mrb[0].mxu0
        %v775 = vpop.f32.mrb[0].mxu0
        %v776 = vadd.f32 0.0, %v775
        %v777 = vpop.f32.mrb[0].mxu0
        %778 = vdwg.mxu0
        %v779 = vsub.f32 %v773, %v605
        %v780 = vsub.f32 %v776, %v606
        %v781 = vpack.c.bf16 %v367, %v366
        %782 = vmatprep.subr.bf16.mxu0 0
        %783 = vmatpush1.bf16.msra.mxu0 %v781
        %784 = vmatprep.subr.bf16.mxu0 0
        %785 = vmatpush1.bf16.msra.mxu0 0
        %786 = vmatprep.subr.bf16.mxu0 0
        %787 = vmatpush1.bf16.msra.mxu0 0
        %788 = vmatprep.subr.bf16.mxu0 0
        %789 = vmatpush1.bf16.msra.mxu0 0
        %790 = vmatprep.subr.bf16.mxu0 0
        %791 = vmatpush1.bf16.msra.mxu0 0
        %792 = vmatprep.subr.bf16.mxu0 0
        %793 = vmatpush1.bf16.msra.mxu0 0
        %794 = vmatprep.subr.bf16.mxu0 0
        %795 = vmatpush1.bf16.msra.mxu0 0
        %796 = vmatprep.subr.bf16.mxu0 0
        %797 = vmatpush1.bf16.msra.mxu0 0
        %798 = vmatprep.subr.bf16.mxu0 0
        %799 = vmatpush1.bf16.msra.mxu0 0
        %800 = vmatprep.subr.bf16.mxu0 0
        %801 = vmatpush1.bf16.msra.mxu0 0
        %802 = vmatprep.subr.bf16.mxu0 0
        %803 = vmatpush1.bf16.msra.mxu0 0
        %804 = vmatprep.subr.bf16.mxu0 0
        %805 = vmatpush1.bf16.msra.mxu0 0
        %806 = vmatprep.subr.bf16.mxu0 0
        %807 = vmatpush1.bf16.msra.mxu0 0
        %808 = vmatprep.subr.bf16.mxu0 0
        %809 = vmatpush1.bf16.msra.mxu0 0
        %810 = vmatprep.subr.bf16.mxu0 0
        %811 = vmatpush1.bf16.msra.mxu0 0
        %812 = vmatprep.subr.bf16.mxu0 0
        %813 = vmatpush1.bf16.msra.mxu0 0
        %814 = vmatprep.mubr.bf16.mxu0 0
        %815 = vmatmul.mubr.bf16.gmra.mrb[0].mxu0 %v386
        %v816 = vpop.f32.mrb[0].mxu0
        %v817 = vadd.f32 0.0, %v816
        %v818 = vpop.f32.mrb[0].mxu0
        %v819 = vpop.f32.mrb[0].mxu0
        %v820 = vadd.f32 0.0, %v819
        %v821 = vpop.f32.mrb[0].mxu0
        %822 = vdwg.mxu0
        %v823 = vpack.c.bf16 %v820, %v817
        %824 = vmatprep.subr.bf16.mxu0 0
        %825 = vmatpush1.bf16.msra.mxu0 %v462
        %826 = vmatprep.subr.bf16.mxu0 0
        %827 = vmatpush1.bf16.msra.mxu0 %v463
        %828 = vmatprep.subr.bf16.mxu0 0
        %829 = vmatpush1.bf16.msra.mxu0 %v464
        %830 = vmatprep.subr.bf16.mxu0 0
        %831 = vmatpush1.bf16.msra.mxu0 %v465
        %832 = vmatprep.subr.bf16.mxu0 0
        %833 = vmatpush1.bf16.msra.mxu0 %v466
        %834 = vmatprep.subr.bf16.mxu0 0
        %835 = vmatpush1.bf16.msra.mxu0 %v467
        %836 = vmatprep.subr.bf16.mxu0 0
        %837 = vmatpush1.bf16.msra.mxu0 %v468
        %838 = vmatprep.subr.bf16.mxu0 0
        %839 = vmatpush1.bf16.msra.mxu0 %v469
        %840 = vmatprep.subr.bf16.mxu0 0
        %841 = vmatpush1.bf16.msra.mxu0 0
        %842 = vmatprep.subr.bf16.mxu0 0
        %843 = vmatpush1.bf16.msra.mxu0 0
        %844 = vmatprep.subr.bf16.mxu0 0
        %845 = vmatpush1.bf16.msra.mxu0 0
        %846 = vmatprep.subr.bf16.mxu0 0
        %847 = vmatpush1.bf16.msra.mxu0 0
        %848 = vmatprep.subr.bf16.mxu0 0
        %849 = vmatpush1.bf16.msra.mxu0 0
        %850 = vmatprep.subr.bf16.mxu0 0
        %851 = vmatpush1.bf16.msra.mxu0 0
        %852 = vmatprep.subr.bf16.mxu0 0
        %853 = vmatpush1.bf16.msra.mxu0 0
        %854 = vmatprep.subr.bf16.mxu0 0
        %855 = vmatpush1.bf16.msra.mxu0 0
        %856 = vmatprep.mubr.bf16.mxu0 0
        %857 = vmatmul.mubr.bf16.gmra.mrb[0].mxu0 %v823
        %v858 = vpop.f32.mrb[0].mxu0
        %v859 = vadd.f32 0.0, %v858
        %v860 = vpop.f32.mrb[0].mxu0
        %v861 = vpop.f32.mrb[0].mxu0
        %v862 = vadd.f32 0.0, %v861
        %v863 = vpop.f32.mrb[0].mxu0
        %864 = vdwg.mxu0
        %v865 = vsub.f32 %v859, %v607
        %v866 = vsub.f32 %v862, %v608
        %v867 = vmul.f32 %v607, 2.0
        %v868 = vmul.f32 %v608, 2.0
        %v869 = vadd.f32 %v867, 0.0001
        %v870 = vadd.f32 %v868, 0.0001
        %v871 = vmul.f32 %v865, 2.0
        %v872 = vmul.f32 %v866, 2.0
        %v873 = vadd.f32 %v871, 0.0009
        %v874 = vadd.f32 %v872, 0.0009
        %v875 = vmul.f32 %v869, %v873
        %v876 = vmul.f32 %v870, %v874
        %v877 = vadd.f32 %v603, %v605
        %v878 = vadd.f32 %v604, %v606
        %v879 = vadd.f32 %v877, 0.0001
        %v880 = vadd.f32 %v878, 0.0001
        %v881 = vadd.f32 %v693, %v779
        %v882 = vadd.f32 %v694, %v780
        %v883 = vadd.f32 %v881, 0.0009
        %v884 = vadd.f32 %v882, 0.0009
        %v885 = vmul.f32 %v879, %v883
        %v886 = vmul.f32 %v880, %v884
        %v887 = vrcp.pop %v885
        %v888 = vmul.f32 %v875, %v887
        %v889 = vrcp.pop %v886
        %v890 = vmul.f32 %v876, %v889
        %v891 = vadd.f32 %v888, %v890
        %892 = vadd.xlane.f32.xlu0 %v891
        %v893 = vpop.xlane.xlu0 %892
        %v894 = vrot.slane %v893, 4
        %v895 = vadd.f32 %v893, %v894
        %v896 = vrot.slane %v895, 2
        %v897 = vadd.f32 %v895, %v896
        %v898 = vrot.slane %v897, 1
        %v899 = vadd.f32 %v897, %v898
        %s900 = vtos %v899
        %v901 = vlaneseq
        %v902 = vshrl.u32 %v901, 7
        %vm903 = vcmp.eq.s32.totalorder %v902, 0
        %v904 = vstv %s900
        %v905 = vsel %vm903, %v904, 0.0
        %vm906 = vcmp.eq.s32.totalorder %v902, 1
        %v907 = vstv %s321
        %v908 = vsel %vm906, %v907, %v905
        %vm909 = vcmp.eq.s32.totalorder %v902, 2
        %v910 = vstv %s331
        %v911 = vsel %vm909, %v910, %v908
        %vm912 = vcmp.eq.s32.totalorder %v902, 3
        %v913 = vstv %s341
        %v914 = vsel %vm912, %v913, %v911
        %vm915 = vcmp.eq.s32.totalorder %v902, 4
        %v916 = vstv %s353
        %v917 = vsel %vm915, %v916, %v914
        %vm918 = vcmp.eq.s32.totalorder %v902, 5
        %v919 = vstv %s365
        %v920 = vsel %vm918, %v919, %v917
        %vm921 = vcmp.eq.s32.totalorder %v902, 6
        %v922 = vstv %s377
        %v923 = vsel %vm921, %v922, %v920
        %924 = vst [vmem:[%s284] sm:$0xff] %v923
        %s925 = sand.u32 %s127, 1
        %s926 = scalar_lea.sflag [#allocation4], %s925
        %s927 = sand.u32 %s127, 1
        %s928 = smul.addr %s927, 8
        %s929 = scalar_lea.vmem [#allocation10], %s928
        // Predicated region
        $region53: #{tpu_custom_call.1} parent=35 // pred_check
          %p930 = pneg %p137
        $region54: #{tpu_custom_call.1} parent=35 // pred_check_branch
          %932 = sbr.rel (%p930) target = $region56
        $region55: #{tpu_custom_call.1} parent=35 // pred_region
          %s934 = ssub.s32 128, 128
          %935 = vsyncadd %s926, %s934
          %s936 = smul.addr %s25, 128
          %s937 = scalar_lea.hbm %s4, %s936
          %s939 = sshll.u32 %s929, 4
          %s940 = int_to_ptr.vmem [resolvable:$true] %s939
          %942 = dma.vmem_to_hbm [thread:$0]  %s940, 128, %s937, %s926
        $region56: #{tpu_custom_call.1} parent=35 // pred_fallthru
          _
      $region36: #{tpu_custom_call.1} parent=5 // pred_fallthru
        _
      %p943 = scmp.le.s32.totalorder 2, %s20
      // Predicated region
      $region57: #{tpu_custom_call.1} parent=5 // pred_check
        %p944 = pneg %p943
      $region58: #{tpu_custom_call.1} parent=5 // pred_check_branch
        %946 = sbr.rel (%p944) target = $region60
      $region59: #{tpu_custom_call.1} parent=5 // pred_region
        %s947 = ssub.s32 %s20, 2
        // Predicated region
        $region61: #{tpu_custom_call.1} parent=59 // pred_check
          %p948 = pneg %p143
        $region62: #{tpu_custom_call.1} parent=59 // pred_check_branch
          %950 = sbr.rel (%p948) target = $region64
        $region63: #{tpu_custom_call.1} parent=59 // pred_region
          %s951 = sand.u32 %s128, 1
          %s952 = scalar_lea.sflag [#allocation4], %s951
          %s953 = sand.u32 %s128, 1
          %s954 = smul.addr %s953, 8
          %s955 = scalar_lea.vmem [#allocation10], %s954
          %956 = dma.done %s952, 128
        $region64: #{tpu_custom_call.1} parent=59 // pred_fallthru
          _
      $region60: #{tpu_custom_call.1} parent=5 // pred_fallthru
        _
    $region6: #{tpu_custom_call.1} parent=1 // loop_footer
      %s24 = sadd.s32 1, %s20
    $region7: #{tpu_custom_call.1} parent=1 // loop_footer_branch
      %19 = sbr.rel target = $region3
    $region8: #{tpu_custom_call.1} parent=1 // loop_exit
      _
    %957 = vsyncpa [#allocation3], 1
    %s958 = scalar_lea.sflag [#allocation3], 1
    %959 = vsyncpa %s958, 1
    %960 = vsyncpa [#allocation6], 1
    %s961 = scalar_lea.sflag [#allocation6], 1
    %962 = vsyncpa %s961, 1
    %963 = vsyncpa [#allocation9], 1
    %964 = vsyncpa [#allocation4], 1
    %s965 = scalar_lea.sflag [#allocation4], 1
    %966 = vsyncpa %s965, 1

</llo_original>
